<compile_context>
chip_gen: v5e
topology: v5e:2x2
jax: 0.10.0
libtpu: 0.0.40
codegen_flags: <defaults>
</compile_context>

<pallas_src>
import jax
import jax.numpy as jnp
from jax import lax
from jax.experimental import pallas as pl
from jax.experimental.pallas import tpu as pltpu

EPS = 1e-12  # torch F.normalize default eps


# ---------------------------------------------------------------------------
# Budget helpers (generation-aware tiling)
# ---------------------------------------------------------------------------
def _vmem_capacity_bytes():
    """Physical VMEM per TensorCore; conservative fallback if the query fails."""
    try:
        cap = int(pltpu.get_tpu_info().vmem_capacity_bytes)
        if cap > 0:
            return cap
    except Exception:
        pass
    return 64 * 1024 * 1024  # v7x-sized fallback: safe on every generation


def _budgets(itemsize):
    """Per-block element budget + live-VMEM accounting.

    Live bytes per block element: double-buffered in + out DMA buffers at the
    real itemsize (4x) plus ~3 f32 in-kernel temporaries (upcast / squares /
    scaled result), so bf16 inputs get larger element budgets than f32.
    """
    vmem_cap = _vmem_capacity_bytes()
    per_elem_live = 4 * itemsize + 3 * 4
    live_budget = (vmem_cap * 2) // 5            # ~25 MiB on v7x, ~51 MiB on v5e/v6e
    elems_budget = max(live_budget // per_elem_live, 128 * 8)
    return vmem_cap, per_elem_live, elems_budget


def _vmem_limit(vmem_cap, block_elems, per_elem_live):
    live_est = block_elems * per_elem_live
    limit = live_est + (8 << 20)                 # headroom for compiler scratch
    limit = max(limit, 32 << 20)                 # never below the usual default
    return int(min(limit, (vmem_cap * 3) // 4))


# ---------------------------------------------------------------------------
# Kernels
# ---------------------------------------------------------------------------
def _l2norm_axis1_kernel(x_ref, o_ref):
    # (bn, C, ts) block in VMEM; L2-normalize over the channel axis (axis=1).
    xf = x_ref[...].astype(jnp.float32)                      # f32 accumulation
    sq_sum = jnp.sum(xf * xf, axis=1, keepdims=True)
    # x / max(||x||, eps) == x * rsqrt(max(||x||^2, eps^2))  (sqrt monotonic)
    inv = lax.rsqrt(jnp.maximum(sq_sum, EPS * EPS))          # EUP op, free under DMA
    o_ref[...] = (xf * inv).astype(o_ref.dtype)


def _l2norm_lastaxis_kernel(x_ref, o_ref):
    # (tn, C) block; L2-normalize over the last (lane-dense channel) axis.
    xf = x_ref[...].astype(jnp.float32)
    sq_sum = jnp.sum(xf * xf, axis=-1, keepdims=True)
    inv = lax.rsqrt(jnp.maximum(sq_sum, EPS * EPS))
    o_ref[...] = (xf * inv).astype(o_ref.dtype)


# ---------------------------------------------------------------------------
# Wrappers
# ---------------------------------------------------------------------------
def _normalize_2d(x2):
    """(N, C) path: channels on the lane axis, batch tiled on sublanes."""
    N, C = x2.shape
    itemsize = jnp.dtype(x2.dtype).itemsize
    vmem_cap, per_elem_live, elems_budget = _budgets(itemsize)

    if N <= 8:
        tn = N                                            # full extent (legal)
    else:
        tn = min(N, max(8, ((elems_budget // max(C, 1)) // 8) * 8))
    grid = (pl.cdiv(N, tn),)

    return pl.pallas_call(
        _l2norm_lastaxis_kernel,
        out_shape=jax.ShapeDtypeStruct((N, C), x2.dtype),
        grid=grid,
        in_specs=[pl.BlockSpec((tn, C), lambda i: (i, 0))],
        out_specs=pl.BlockSpec((tn, C), lambda i: (i, 0)),
        compiler_params=pltpu.CompilerParams(
            dimension_semantics=("parallel",),
            vmem_limit_bytes=_vmem_limit(vmem_cap, tn * C, per_elem_live),
        ),
    )(x2)


def _normalize_channels_3d(x3):
    """(N, C, HW) path: spatial on lanes (dense), reduce over channels."""
    N, C, HW = x3.shape
    itemsize = jnp.dtype(x3.dtype).itemsize
    vmem_cap, per_elem_live, elems_budget = _budgets(itemsize)

    # Spatial tile: largest 128-multiple within budget; full extent when the
    # whole spatial dim fits (also covers small / non-128-multiple HW).
    ts_max = max(elems_budget // max(C, 1), 128)
    if ts_max >= HW or HW <= 128:
        ts = HW
    else:
        ts = (ts_max // 128) * 128     # >=128; ragged last block masked by Pallas

    # Pack several batch elements per block when spatial tiles are small so
    # DMAs stay ~MiB scale and ~0.35us/grid-step overhead is amortized.
    bn = max(1, min(N, elems_budget // max(C * ts, 1)))

    grid_n = pl.cdiv(N, bn)
    grid_s = pl.cdiv(HW, ts)

    # Put the longer parallel axis first so it splits evenly across the two
    # TensorCores on v7x (neutral on v5e/v6e).
    if grid_s >= grid_n:
        grid = (grid_s, grid_n)
        index_map = lambda s, n: (n, 0, s)
    else:
        grid = (grid_n, grid_s)
        index_map = lambda n, s: (n, 0, s)

    return pl.pallas_call(
        _l2norm_axis1_kernel,
        out_shape=jax.ShapeDtypeStruct((N, C, HW), x3.dtype),
        grid=grid,
        in_specs=[pl.BlockSpec((bn, C, ts), index_map)],
        out_specs=pl.BlockSpec((bn, C, ts), index_map),
        compiler_params=pltpu.CompilerParams(
            dimension_semantics=("parallel", "parallel"),
            vmem_limit_bytes=_vmem_limit(vmem_cap, bn * C * ts, per_elem_live),
        ),
    )(x3)


def identity_layer_forward(x):
    """Pallas TPU implementation of torch.nn.functional.normalize(x, dim=1)."""
    if x.ndim < 2:
        raise ValueError("F.normalize(dim=1) requires at least 2 dimensions")
    N, C = x.shape[0], x.shape[1]
    HW = 1
    for d in x.shape[2:]:
        HW *= d

    if HW == 1:
        # 2-D input (or trailing dims all 1): channels on the lane axis.
        out2 = _normalize_2d(x.reshape(N, C))
        return out2.reshape(x.shape)

    # Lane-dense (N, C, H*W) view; contiguous reshape is free.
    out3 = _normalize_channels_3d(x.reshape(N, C, HW))
    return out3.reshape(x.shape)


# ---------------------------------------------------------------------------
# Self-test
# ---------------------------------------------------------------------------
def _ref_normalize_dim1(x):
    # Same semantics as torch.nn.functional.normalize(x, dim=1), f32 accumulation.
    xf = x.astype(jnp.float32)
    norm = jnp.sqrt(jnp.sum(xf * xf, axis=1, keepdims=True))
    return (xf / jnp.maximum(norm, EPS)).astype(x.dtype)


if __name__ == "__main__":
    key = jax.random.PRNGKey(0)
    k1, k2 = jax.random.split(key)

    # 4-D NCHW path
    x = jax.random.normal(k1, (2, 4, 16, 16), dtype=jnp.float32)
    out = jax.block_until_ready(identity_layer_forward(x))
    ref = _ref_normalize_dim1(x)
    assert out.shape == x.shape and out.dtype == x.dtype
    assert jnp.allclose(out, ref, atol=1e-6, rtol=1e-6)

    # 2-D (N, C) path
    x2 = jax.random.normal(k2, (8, 32), dtype=jnp.float32)
    out2 = jax.block_until_ready(identity_layer_forward(x2))
    ref2 = _ref_normalize_dim1(x2)
    assert out2.shape == x2.shape and out2.dtype == x2.dtype
    assert jnp.allclose(out2, ref2, atol=1e-6, rtol=1e-6)

    print("KERNEL_OK")
</pallas_src>

<mosaic_0001>
module attributes {stable_mosaic.version = 11 : i64} {
  func.func @_l2norm_axis1_kernel(%arg0: i32, %arg1: i32, %arg2: memref<2x4x256xf32, #tpu.memory_space<vmem>>, %arg3: memref<2x4x256xf32, #tpu.memory_space<vmem>>) attributes {dimension_semantics = [#tpu.dimension_semantics<parallel>, #tpu.dimension_semantics<parallel>], iteration_bounds = array<i64: 1, 1>, scalar_prefetch = 0 : i64, scratch_operands = 0 : i64, tpu.core_type = #tpu.core_type<tc>, window_params = [{transform_indices = @transform_0, window_bounds = array<i64: 2, 4, 256>}, {transform_indices = @transform_1, window_bounds = array<i64: 2, 4, 256>}]} {
    %c0 = arith.constant 0 : index
    %c0_0 = arith.constant 0 : index
    %c0_1 = arith.constant 0 : index
    %0 = vector.load %arg2[%c0, %c0_0, %c0_1] : memref<2x4x256xf32, #tpu.memory_space<vmem>>, vector<2x4x256xf32>
    %1 = arith.mulf %0, %0 : vector<2x4x256xf32>
    %cst = arith.constant dense<0.000000e+00> : vector<2x256xf32>
    %2 = vector.multi_reduction <add>, %1, %cst [1] : vector<2x4x256xf32> to vector<2x256xf32>
    %3 = vector.shape_cast %2 : vector<2x256xf32> to vector<2x1x256xf32>
    %cst_2 = arith.constant 1.000000e-24 : f32
    %4 = vector.broadcast %cst_2 : f32 to vector<2x1x256xf32>
    %5 = arith.maximumf %3, %4 : vector<2x1x256xf32>
    %6 = math.rsqrt %5 : vector<2x1x256xf32>
    %7 = vector.broadcast %6 : vector<2x1x256xf32> to vector<2x4x256xf32>
    %8 = arith.mulf %0, %7 : vector<2x4x256xf32>
    %c0_3 = arith.constant 0 : index
    %c0_4 = arith.constant 0 : index
    %c0_5 = arith.constant 0 : index
    %9 = vector.load %arg3[%c0_3, %c0_4, %c0_5] : memref<2x4x256xf32, #tpu.memory_space<vmem>>, vector<2x4x256xf32>
    tpu.vector_store %arg3[%c0_3, %c0_4, %c0_5], %8 {strides = array<i32>} : memref<2x4x256xf32, #tpu.memory_space<vmem>>, vector<2x4x256xf32>,
    return
  }
  func.func @transform_0(%arg0: i32, %arg1: i32) -> (i32, i32, i32) {
    %c0_i32 = arith.constant 0 : i32
    %c0_i32_0 = arith.constant 0 : i32
    return %arg1, %c0_i32, %arg0 : i32, i32, i32
  }
  func.func @transform_1(%arg0: i32, %arg1: i32) -> (i32, i32, i32) {
    %c0_i32 = arith.constant 0 : i32
    %c0_i32_0 = arith.constant 0 : i32
    return %arg1, %c0_i32, %arg0 : i32, i32, i32
  }
}

</mosaic_0001>

<llo_original>
// kernel: tpu_custom_call.1
$region0: #{tpu_custom_call.1}
  #allocation0 [shape = 'u32[]', space=smem, size = 0x4, offset = 0x4, fixed_abs, tag = 'smem constant byte address 0x4 - core index']
  #allocation1 [shape = 'u32[72,128]{1,0:T(1,128)}', space=vmem, size = 0x9000, scoped, tag = 'internal scratch']
  %s0 = inlined_call_operand.hbm [shape: f32[2,4,256], index: 0, kind: input, shape index: {}]
  %s1 = inlined_call_operand.hbm [shape: f32[2,4,256], index: 1, kind: output, shape index: {}]
  %s2 = sld [smem:[#allocation0]]
  $region18: #{tpu_custom_call.1} parent=0
    _
  %s4 = ssub.s32 1, %s2
  %s5 = scalar_select 0, %s4, %s2
  $region1: #{tpu_custom_call.1} parent=0
    #allocation2 [shape = 'u8[8192]{0}', space=vmem, size = 0x2000, scoped, tag = 'input window, operand 0, single buffered']
    #allocation3 [shape = 's32[1]{0}', space=sflag, size = 0x4, scoped, tag = 'scoped memory for tpu_custom_call.1']
    #allocation4 [shape = 's32[1]{0}', space=sflag, size = 0x4, scoped, tag = 'scoped memory for tpu_custom_call.1']
    #allocation5 [shape = 'u8[8192]{0}', space=vmem, size = 0x2000, scoped, tag = 'output window, operand 0, single buffered']
    %6 = vsyncpa [#allocation3], 0
    %7 = vsyncpa [#allocation4], 0
    // Predicated region
    $region2: #{tpu_custom_call.1} parent=1 // pred_check
      _
    $region3: #{tpu_custom_call.1} parent=1 // pred_check_branch
      %9 = sbr.rel (0) target = $region5
    $region4: #{tpu_custom_call.1} parent=1 // pred_region
      %11 = vsyncadd [#allocation3], 0
      %s12 = sshll.u32 %s0, 4
      %s13 = int_to_ptr.hbm [resolvable:$true] %s12
      %s14 = sshll.u32 [#allocation2], 4
      %s15 = int_to_ptr.vmem [resolvable:$true] %s14
      %20 = dma.hbm_to_vmem [thread:$0]  %s13, 256, %s15, [#allocation3], 128, 128, 8
    $region5: #{tpu_custom_call.1} parent=1 // pred_fallthru
      _
    // Predicated region
    $region6: #{tpu_custom_call.1} parent=1 // pred_check
      _
    $region7: #{tpu_custom_call.1} parent=1 // pred_check_branch
      %22 = sbr.rel (0) target = $region9
    $region8: #{tpu_custom_call.1} parent=1 // pred_region
      %24 = dma.done [#allocation3], 256
    $region9: #{tpu_custom_call.1} parent=1 // pred_fallthru
      _
    %v25 = vld [vmem:[#allocation2] sm:$0xff]
    %v26 = vld [vmem:[#allocation2 + $0x8] sm:$0xff]
    %v27 = vmul.f32 %v25, %v25
    %v28 = vmul.f32 %v26, %v26
    %31 = vst [vmem:[#allocation1] ss:$2 sm:$0xff] %v27
    %v32 = vld.sshfl [vmem:[#allocation1] sm:$0xff pattern:$0x75316420]
    %v33 = vld.sshfl [vmem:[#allocation1 + $0x8] sm:$0xff pattern:$0x75316420]
    %s34 = scalar_lea.vmem [#allocation1], 16
    %35 = vst [vmem:[%s34] ss:$2 sm:$0xff] %v28
    %v36 = vld.sshfl [vmem:[#allocation1 + $0x10] sm:$0xff pattern:$0x75316420]
    %v37 = vld.sshfl [vmem:[#allocation1 + $0x18] sm:$0xff pattern:$0x75316420]
    %vm42 = vcmask 1043456
    %v43 = vsel %vm42, %v32, 0.0
    %v44 = vrot.slane %v43, 4
    %v45 = vadd.f32 %v43, %v44
    %v46 = vrot.slane %v45, 2
    %v47 = vadd.f32 %v45, %v46
    %v48 = vrot.slane %v47, 1
    %v49 = vadd.f32 %v47, %v48
    %v50 = vsel %vm42, %v33, 0.0
    %v51 = vrot.slane %v50, 4
    %v52 = vadd.f32 %v50, %v51
    %v53 = vrot.slane %v52, 2
    %v54 = vadd.f32 %v52, %v53
    %v55 = vrot.slane %v54, 1
    %v56 = vadd.f32 %v54, %v55
    %v57 = vsel %vm42, %v36, 0.0
    %v58 = vrot.slane %v57, 4
    %v59 = vadd.f32 %v57, %v58
    %v60 = vrot.slane %v59, 2
    %v61 = vadd.f32 %v59, %v60
    %v62 = vrot.slane %v61, 1
    %v63 = vadd.f32 %v61, %v62
    %v64 = vsel %vm42, %v37, 0.0
    %v65 = vrot.slane %v64, 4
    %v66 = vadd.f32 %v64, %v65
    %v67 = vrot.slane %v66, 2
    %v68 = vadd.f32 %v66, %v67
    %v69 = vrot.slane %v68, 1
    %v70 = vadd.f32 %v68, %v69
    %v71 = vmax.f32 %v49, 1e-24
    %v72 = vmax.f32 %v56, 1e-24
    %v73 = vmax.f32 %v63, 1e-24
    %v74 = vmax.f32 %v70, 1e-24
    %v75 = vrsqrt.pop %v71
    %v76 = vmul.f32 %v75, %v71
    %v77 = vmul.f32 %v76, %v75
    %v78 = vmul.f32 0.5, %v77
    %v79 = vsub.f32 1.5, %v78
    %v80 = vmul.f32 %v75, %v79
    %vm81 = vweird.f32 %v71
    %vm82 = vweird.f32 %v75
    %vm83 = vmor %vm81, %vm82
    %v84 = vsel %vm83, %v75, %v80
    %v85 = vrsqrt.pop %v72
    %v86 = vmul.f32 %v85, %v72
    %v87 = vmul.f32 %v86, %v85
    %v88 = vmul.f32 0.5, %v87
    %v89 = vsub.f32 1.5, %v88
    %v90 = vmul.f32 %v85, %v89
    %vm91 = vweird.f32 %v72
    %vm92 = vweird.f32 %v85
    %vm93 = vmor %vm91, %vm92
    %v94 = vsel %vm93, %v85, %v90
    %v95 = vrsqrt.pop %v73
    %v96 = vmul.f32 %v95, %v73
    %v97 = vmul.f32 %v96, %v95
    %v98 = vmul.f32 0.5, %v97
    %v99 = vsub.f32 1.5, %v98
    %v100 = vmul.f32 %v95, %v99
    %vm101 = vweird.f32 %v73
    %vm102 = vweird.f32 %v95
    %vm103 = vmor %vm101, %vm102
    %v104 = vsel %vm103, %v95, %v100
    %v105 = vrsqrt.pop %v74
    %v106 = vmul.f32 %v105, %v74
    %v107 = vmul.f32 %v106, %v105
    %v108 = vmul.f32 0.5, %v107
    %v109 = vsub.f32 1.5, %v108
    %v110 = vmul.f32 %v105, %v109
    %vm111 = vweird.f32 %v74
    %vm112 = vweird.f32 %v105
    %vm113 = vmor %vm111, %vm112
    %v114 = vsel %vm113, %v105, %v110
    %v119 = vrot.slane %v94, 4
    %v120 = vrot.slane %v114, 4
    %v121 = vsel %vm42, %v84, %v119
    %v122 = vsel %vm42, %v104, %v120
    %v125 = vmul.f32 %v25, %v121
    %v126 = vmul.f32 %v26, %v122
    %127 = vst [vmem:[#allocation5] sm:$0xff] %v125
    %128 = vst [vmem:[#allocation5 + $0x8] sm:$0xff] %v126
    // Predicated region
    $region10: #{tpu_custom_call.1} parent=1 // pred_check
      _
    $region11: #{tpu_custom_call.1} parent=1 // pred_check_branch
      %130 = sbr.rel (0) target = $region13
    $region12: #{tpu_custom_call.1} parent=1 // pred_region
      %132 = vsyncadd [#allocation4], 0
      %s133 = sshll.u32 [#allocation5], 4
      %s134 = int_to_ptr.vmem [resolvable:$true] %s133
      %s135 = sshll.u32 %s1, 4
      %s136 = int_to_ptr.hbm [resolvable:$true] %s135
      %141 = dma.vmem_to_hbm [thread:$0]  %s134, 256, %s136, [#allocation4], 128, 128, 8
    $region13: #{tpu_custom_call.1} parent=1 // pred_fallthru
      _
    // Predicated region
    $region14: #{tpu_custom_call.1} parent=1 // pred_check
      _
    $region15: #{tpu_custom_call.1} parent=1 // pred_check_branch
      %143 = sbr.rel (0) target = $region17
    $region16: #{tpu_custom_call.1} parent=1 // pred_region
      %145 = dma.done [#allocation4], 256
    $region17: #{tpu_custom_call.1} parent=1 // pred_fallthru
      _
    %146 = vsyncpa [#allocation3], 1
    %147 = vsyncpa [#allocation4], 1

</llo_original>
